<compile_context>
chip_gen: v7x
topology: tpu7x:2x2x1
jax: 0.10.0
libtpu: 0.0.40
codegen_flags: <defaults>
</compile_context>

<pallas_src>
import functools

import jax
import jax.numpy as jnp
from jax import lax
from jax.experimental import pallas as pl
from jax.experimental.pallas import tpu as pltpu

LANE = 128      # lane width: padded hidden / output feature dims
SUBLANE = 8


def _ceil_to(x, m):
    return (x + m - 1) // m * m


def posenet_kernel(x_ref, p_ref, out_ref, *, in_dims, b_actual,
                   off_b1, off_w2, off_b2):
    x = x_ref[...]                                     # (B_pad, in_dims) f32

    # Static slices into the single packed parameter slab (zero extra DMAs).
    w1 = p_ref[0:in_dims, :]                           # (in_dims, 128)  K x N
    b1 = p_ref[off_b1:off_b1 + 1, :]                   # (1, 128)
    w2 = p_ref[off_w2:off_w2 + LANE, :]                # (128, 128)      K x N
    b2 = p_ref[off_b2:off_b2 + 1, :]                   # (1, 128)

    # linear1 + ReLU.  Padded hidden columns have zero weight/bias -> h == 0.
    h = jnp.dot(x, w1, preferred_element_type=jnp.float32) + b1
    h = jnp.maximum(h, 0.0)

    # linear2.  Padded K rows / N cols of w2 and padded b2 cols are zero,
    # so out[:, out_dims:] == 0 exactly.
    out = jnp.dot(h, w2, preferred_element_type=jnp.float32) + b2   # (B_pad,128)

    # torch.norm(wpqr): Frobenius norm over the whole wpqr block (cols >= 3),
    # excluding batch-pad rows.  Lane-reduce first (XLU), then sublane reduce.
    lane = lax.broadcasted_iota(jnp.int32, out.shape, 1)
    row = lax.broadcasted_iota(jnp.int32, out.shape, 0)
    is_wpqr = lane >= 3
    valid = jnp.logical_and(is_wpqr, row < b_actual)
    masked = jnp.where(valid, out, 0.0)
    ss_row = jnp.sum(masked * masked, axis=1, keepdims=True)        # (B_pad, 1)
    inv_norm = lax.rsqrt(jnp.sum(ss_row))                           # EUP rsqrt

    # xyz columns unchanged, wpqr (and harmless pad) columns scaled ->
    # one lane-dense unmasked store.
    scale = jnp.where(is_wpqr, inv_norm, 1.0)
    out_ref[...] = out * scale


def prepare_posenet_params(w1, b1, w2, b2):
    """One-time parameter packing (hoisted off the forward hot path).

    PyTorch Linear layouts: w1 (hidden, in), b1 (hidden,), w2 (out, hidden),
    b2 (out,).  Packs W1^T, b1, W2^T, b2 into a single lane-dense (rows, 128)
    f32 slab (MXU-canonical: K on sublanes, N on lanes, zero-padded), so the
    kernel needs only two input DMAs total.
    """
    hidden, in_dims = w1.shape
    out_dims = w2.shape[0]
    assert 4 <= out_dims <= LANE, "out_dims must be in [4, 128]"
    assert hidden <= LANE, "hidden_dims must be <= 128 for this packing"

    off_b1 = _ceil_to(in_dims, SUBLANE)
    off_w2 = off_b1 + SUBLANE
    off_b2 = off_w2 + LANE
    rows = off_b2 + SUBLANE

    packed = jnp.zeros((rows, LANE), jnp.float32)
    packed = packed.at[0:in_dims, 0:hidden].set(w1.T.astype(jnp.float32))
    packed = packed.at[off_b1, 0:hidden].set(b1.astype(jnp.float32))
    packed = packed.at[off_w2:off_w2 + hidden, 0:out_dims].set(
        w2.T.astype(jnp.float32))
    packed = packed.at[off_b2, 0:out_dims].set(b2.astype(jnp.float32))

    meta = dict(in_dims=in_dims, hidden=hidden, out_dims=out_dims,
                off_b1=off_b1, off_w2=off_w2, off_b2=off_b2)
    return packed, meta


def make_posenet(w1, b1, w2, b2):
    """Returns a jitted forward(x) -> (xyz, wpqr_norm) with params prepped once."""
    packed, meta = prepare_posenet_params(w1, b1, w2, b2)
    in_dims = meta["in_dims"]
    out_dims = meta["out_dims"]

    @jax.jit
    def forward(x):
        B = x.shape[0]
        assert x.shape[1] == in_dims
        b_pad = _ceil_to(max(B, SUBLANE), SUBLANE)

        x_f32 = x.astype(jnp.float32)
        if b_pad != B:
            x_f32 = jnp.pad(x_f32, ((0, b_pad - B), (0, 0)))

        # Size-derived VMEM budget (x + params + out, 2x headroom), min 4 MiB.
        buf_bytes = (b_pad * in_dims + packed.size + b_pad * LANE) * 4
        vmem_limit = max(4 << 20, 2 * buf_bytes + (1 << 20))

        kernel = functools.partial(
            posenet_kernel, in_dims=in_dims, b_actual=B,
            off_b1=meta["off_b1"], off_w2=meta["off_w2"],
            off_b2=meta["off_b2"])

        y = pl.pallas_call(
            kernel,
            out_shape=jax.ShapeDtypeStruct((b_pad, LANE), jnp.float32),
            in_specs=[pl.BlockSpec(memory_space=pltpu.MemorySpace.VMEM)] * 2,
            out_specs=pl.BlockSpec(memory_space=pltpu.MemorySpace.VMEM),
            compiler_params=pltpu.CompilerParams(vmem_limit_bytes=vmem_limit),
        )(x_f32, packed)

        # Free slices in the wrapper (no sub-128-lane stores inside the kernel).
        xyz = y[:B, 0:3]
        wpqr_norm = y[:B, 3:out_dims]
        return xyz, wpqr_norm

    return forward


def posenet_reference(x, w1, b1, w2, b2):
    h = jnp.maximum(x @ w1.T + b1, 0.0)
    out = h @ w2.T + b2
    xyz = out[:, 0:3]
    wpqr = out[:, 3:]
    return xyz, wpqr / jnp.sqrt(jnp.sum(wpqr * wpqr))


if __name__ == "__main__":
    # Keep both the in-kernel MXU matmuls and the XLA reference at full f32
    # accuracy so the small-shape correctness check is meaningful.
    jax.config.update("jax_default_matmul_precision", "highest")

    B, IN_DIMS, HIDDEN_DIMS, OUT_DIMS = 8, 32, 32, 7  # 3 xyz + 4 quaternion

    key = jax.random.PRNGKey(0)
    kx, kw1, kb1, kw2, kb2 = jax.random.split(key, 5)

    x = jax.random.normal(kx, (B, IN_DIMS), dtype=jnp.float32)
    # PyTorch Linear parameter shapes: weight (out, in), bias (out,)
    w1 = jax.random.normal(kw1, (HIDDEN_DIMS, IN_DIMS), dtype=jnp.float32) * 0.1
    b1 = jax.random.normal(kb1, (HIDDEN_DIMS,), dtype=jnp.float32) * 0.1
    w2 = jax.random.normal(kw2, (OUT_DIMS, HIDDEN_DIMS), dtype=jnp.float32) * 0.1
    b2 = jax.random.normal(kb2, (OUT_DIMS,), dtype=jnp.float32) * 0.1

    posenet = make_posenet(w1, b1, w2, b2)   # one-time param prep (hoisted)

    xyz, wpqr_norm = posenet(x)
    jax.block_until_ready((xyz, wpqr_norm))

    xyz_ref, wpqr_ref = posenet_reference(x, w1, b1, w2, b2)
    assert xyz.shape == (B, 3) and wpqr_norm.shape == (B, OUT_DIMS - 3)
    assert jnp.allclose(xyz, xyz_ref, atol=1e-4, rtol=1e-4)
    assert jnp.allclose(wpqr_norm, wpqr_ref, atol=1e-4, rtol=1e-4)

    print("KERNEL_OK")
</pallas_src>

<mosaic_0001>
module attributes {stable_mosaic.version = 11 : i64} {
  func.func @posenet_kernel(%arg0: memref<8x32xf32, #tpu.memory_space<vmem>>, %arg1: memref<176x128xf32, #tpu.memory_space<vmem>>, %arg2: memref<8x128xf32, #tpu.memory_space<vmem>>) attributes {dimension_semantics = [], scalar_prefetch = 0 : i64, scratch_operands = 0 : i64, tpu.core_type = #tpu.core_type<tc>} {
    %c0 = arith.constant 0 : index
    %c0_0 = arith.constant 0 : index
    %0 = vector.load %arg0[%c0, %c0_0] : memref<8x32xf32, #tpu.memory_space<vmem>>, vector<8x32xf32>
    %c0_1 = arith.constant 0 : index
    %c0_2 = arith.constant 0 : index
    %1 = vector.load %arg1[%c0_1, %c0_2] : memref<176x128xf32, #tpu.memory_space<vmem>>, vector<32x128xf32>
    %c32 = arith.constant 32 : index
    %c0_3 = arith.constant 0 : index
    %2 = vector.load %arg1[%c32, %c0_3] : memref<176x128xf32, #tpu.memory_space<vmem>>, vector<1x128xf32>
    %c40 = arith.constant 40 : index
    %c0_4 = arith.constant 0 : index
    %3 = vector.load %arg1[%c40, %c0_4] : memref<176x128xf32, #tpu.memory_space<vmem>>, vector<128x128xf32>
    %c168 = arith.constant 168 : index
    %c0_5 = arith.constant 0 : index
    %4 = vector.load %arg1[%c168, %c0_5] : memref<176x128xf32, #tpu.memory_space<vmem>>, vector<1x128xf32>
    %cst = arith.constant dense<0.000000e+00> : vector<8x128xf32>
    %5 = tpu.matmul %0, %1, %cst {dimension_numbers = #tpu.dot_dimension_numbers<[1], [0], [0], [1], [0, 0, 1, 1], [], []>, precision = #tpu.contract_precision<fp32>} : vector<8x32xf32>, vector<32x128xf32>, vector<8x128xf32> -> vector<8x128xf32>
    %6 = vector.broadcast %2 : vector<1x128xf32> to vector<8x128xf32>
    %7 = arith.addf %5, %6 : vector<8x128xf32>
    %cst_6 = arith.constant 0.000000e+00 : f32
    %8 = vector.broadcast %cst_6 : f32 to vector<8x128xf32>
    %9 = arith.maximumf %7, %8 : vector<8x128xf32>
    %cst_7 = arith.constant dense<0.000000e+00> : vector<8x128xf32>
    %10 = tpu.matmul %9, %3, %cst_7 {dimension_numbers = #tpu.dot_dimension_numbers<[1], [0], [0], [1], [0, 0, 1, 1], [], []>, precision = #tpu.contract_precision<fp32>} : vector<8x128xf32>, vector<128x128xf32>, vector<8x128xf32> -> vector<8x128xf32>
    %11 = vector.broadcast %4 : vector<1x128xf32> to vector<8x128xf32>
    %12 = arith.addf %10, %11 : vector<8x128xf32>
    %13 = tpu.iota {dimensions = array<i32: 1>} : vector<8x128xi32>
    %14 = tpu.iota {dimensions = array<i32: 0>} : vector<8x128xi32>
    %c3_i32 = arith.constant 3 : i32
    %15 = vector.broadcast %c3_i32 : i32 to vector<8x128xi32>
    %16 = arith.cmpi sge, %13, %15 : vector<8x128xi32>
    %c8_i32 = arith.constant 8 : i32
    %17 = vector.broadcast %c8_i32 : i32 to vector<8x128xi32>
    %18 = arith.cmpi slt, %14, %17 : vector<8x128xi32>
    %19 = arith.andi %16, %18 : vector<8x128xi1>
    %cst_8 = arith.constant 0.000000e+00 : f32
    %20 = vector.broadcast %cst_8 : f32 to vector<8x128xf32>
    %21 = arith.select %19, %12, %20 : vector<8x128xi1>, vector<8x128xf32>
    %22 = arith.mulf %21, %21 : vector<8x128xf32>
    %cst_9 = arith.constant dense<0.000000e+00> : vector<8xf32>
    %23 = vector.multi_reduction <add>, %22, %cst_9 [1] : vector<8x128xf32> to vector<8xf32>
    %24 = vector.shape_cast %23 : vector<8xf32> to vector<8x1xf32>
    %25 = vector.shape_cast %24 : vector<8x1xf32> to vector<1x8x1xf32>
    %cst_10 = arith.constant dense<0.000000e+00> : vector<1xf32>
    %26 = vector.multi_reduction <add>, %25, %cst_10 [1, 2] : vector<1x8x1xf32> to vector<1xf32>
    %27 = vector.shape_cast %26 : vector<1xf32> to vector<1x1x1xf32>
    %28 = vector.extract %27[0, 0, 0] : f32 from vector<1x1x1xf32>
    %29 = math.rsqrt %28 : f32
    %cst_11 = arith.constant 1.000000e+00 : f32
    %30 = vector.broadcast %29 : f32 to vector<8x128xf32>
    %31 = vector.broadcast %cst_11 : f32 to vector<8x128xf32>
    %32 = arith.select %16, %30, %31 : vector<8x128xi1>, vector<8x128xf32>
    %33 = arith.mulf %12, %32 : vector<8x128xf32>
    %c0_12 = arith.constant 0 : index
    %c0_13 = arith.constant 0 : index
    %34 = vector.load %arg2[%c0_12, %c0_13] : memref<8x128xf32, #tpu.memory_space<vmem>>, vector<8x128xf32>
    tpu.vector_store %arg2[%c0_12, %c0_13], %33 {strides = array<i32>} : memref<8x128xf32, #tpu.memory_space<vmem>>, vector<8x128xf32>,
    return
  }
}

</mosaic_0001>

<llo_original>
// kernel: forward.1
$region0: #{forward.1}
  #allocation0 [shape = 'u32[]', space=smem, size = 0x4, offset = 0x4, fixed_abs, tag = 'smem constant byte address 0x4 - core index']
  #allocation1 [shape = 'u32[144,128]{1,0:T(1,128)}', space=vmem, size = 0x12000, scoped, tag = 'internal scratch']
  %s0 = inlined_call_operand.hbm [shape: f32[8,32], index: 0, kind: input, shape index: {}]
  %s1 = inlined_call_operand.hbm [shape: f32[176,128], index: 1, kind: input, shape index: {}]
  %s2 = inlined_call_operand.vmem [shape: f32[8,128], index: 2, kind: output, shape index: {}]
  %s3 = sld [smem:[#allocation0]]
  $region26: #{forward.1} parent=0
    _
  %s5 = ssub.s32 1, %s3
  %s6 = scalar_select 0, %s5, %s3
  $region1: #{forward.1} parent=0
    #allocation2 [shape = 'u8[4096]{0}', space=vmem, size = 0x1000, scoped, tag = 'input window, operand 0, single buffered']
    #allocation3 [shape = 's32[1]{0}', space=sflag, size = 0x4, scoped, tag = 'scoped memory for forward.1']
    #allocation4 [shape = 'u8[90112]{0}', space=vmem, size = 0x16000, scoped, tag = 'input window, operand 1, single buffered']
    #allocation5 [shape = 's32[1]{0}', space=sflag, size = 0x4, scoped, tag = 'scoped memory for forward.1']
    %7 = vsyncpa [#allocation3], 0
    %8 = vsyncpa [#allocation5], 0
    // Predicated region
    $region2: #{forward.1} parent=1 // pred_check
      _
    $region3: #{forward.1} parent=1 // pred_check_branch
      %10 = sbr.rel (0) target = $region5
    $region4: #{forward.1} parent=1 // pred_region
      %s12 = ssub.s32 128, 128
      %13 = vsyncadd [#allocation3], %s12
      %s15 = sshll.u32 [#allocation2], 4
      %s16 = int_to_ptr.vmem [resolvable:$true] %s15
      %18 = dma.hbm_to_vmem [thread:$0]  %s0, 128, %s16, [#allocation3]
    $region5: #{forward.1} parent=1 // pred_fallthru
      _
    // Predicated region
    $region6: #{forward.1} parent=1 // pred_check
      _
    $region7: #{forward.1} parent=1 // pred_check_branch
      %20 = sbr.rel (0) target = $region9
    $region8: #{forward.1} parent=1 // pred_region
      %s22 = ssub.s32 2816, 2816
      %23 = vsyncadd [#allocation5], %s22
      %s24 = sshll.u32 [#allocation4], 4
      %s25 = int_to_ptr.vmem [resolvable:$true] %s24
      %30 = dma.hbm_to_vmem [thread:$0]  %s1, 2816, %s25, [#allocation5], 128, 128, 8
    $region9: #{forward.1} parent=1 // pred_fallthru
      _
    // Predicated region
    $region10: #{forward.1} parent=1 // pred_check
      _
    $region11: #{forward.1} parent=1 // pred_check_branch
      %32 = sbr.rel (0) target = $region13
    $region12: #{forward.1} parent=1 // pred_region
      %33 = dma.done [#allocation3], 128
    $region13: #{forward.1} parent=1 // pred_fallthru
      _
    // Predicated region
    $region14: #{forward.1} parent=1 // pred_check
      _
    $region15: #{forward.1} parent=1 // pred_check_branch
      %35 = sbr.rel (0) target = $region17
    $region16: #{forward.1} parent=1 // pred_region
      %36 = dma.done [#allocation5], 2816
    $region17: #{forward.1} parent=1 // pred_fallthru
      _
    %v37 = vld [vmem:[#allocation2] sm:$0xff]
    %v38 = vld [vmem:[#allocation4] sm:$0xff]
    %v39 = vld [vmem:[#allocation4 + $0x8] sm:$0xff]
    %v40 = vld [vmem:[#allocation4 + $0x10] sm:$0xff]
    %v41 = vld [vmem:[#allocation4 + $0x18] sm:$0xff]
    %v42 = vld [vmem:[#allocation4 + $0x20] sm:$0x1]
    %v43 = vld [vmem:[#allocation4 + $0x28] sm:$0xff]
    %v44 = vld [vmem:[#allocation4 + $0x30] sm:$0xff]
    %v45 = vld [vmem:[#allocation4 + $0x38] sm:$0xff]
    %v46 = vld [vmem:[#allocation4 + $0x40] sm:$0xff]
    %v47 = vld [vmem:[#allocation4 + $0x48] sm:$0xff]
    %v48 = vld [vmem:[#allocation4 + $0x50] sm:$0xff]
    %v49 = vld [vmem:[#allocation4 + $0x58] sm:$0xff]
    %v50 = vld [vmem:[#allocation4 + $0x60] sm:$0xff]
    %v51 = vld [vmem:[#allocation4 + $0x68] sm:$0xff]
    %v52 = vld [vmem:[#allocation4 + $0x70] sm:$0xff]
    %v53 = vld [vmem:[#allocation4 + $0x78] sm:$0xff]
    %v54 = vld [vmem:[#allocation4 + $0x80] sm:$0xff]
    %v55 = vld [vmem:[#allocation4 + $0x88] sm:$0xff]
    %v56 = vld [vmem:[#allocation4 + $0x90] sm:$0xff]
    %v57 = vld [vmem:[#allocation4 + $0x98] sm:$0xff]
    %v58 = vld [vmem:[#allocation4 + $0xa0] sm:$0xff]
    %v59 = vld [vmem:[#allocation4 + $0xa8] sm:$0x1]
    %v60 = vlaneseq
    %v61 = vshrl.u32 %v60, 7
    %v62 = vsub.s32 0, %v61
    %v63 = vrot.slane %v42, %v62
    %vm64 = vcmask 261120
    %v66 = vsel %vm64, %v37, 0
    %68 = vmatprep.subr.mxu0 0.0
    %v69 = vand.u32 %v38, 4294901760
    %70 = vmatpush1.msra.mxu0 %v69
    %71 = vmatprep.subr.mxu0 0.0
    %v72 = vand.u32 %v39, 4294901760
    %73 = vmatpush1.msra.mxu0 %v72
    %74 = vmatprep.subr.mxu0 0.0
    %v75 = vand.u32 %v40, 4294901760
    %76 = vmatpush1.msra.mxu0 %v75
    %77 = vmatprep.subr.mxu0 0.0
    %v78 = vand.u32 %v41, 4294901760
    %79 = vmatpush1.msra.mxu0 %v78
    %80 = vmatprep.subr.mxu0 0.0
    %81 = vmatpush1.msra.mxu0 0.0
    %82 = vmatprep.subr.mxu0 0.0
    %83 = vmatpush1.msra.mxu0 0.0
    %84 = vmatprep.subr.mxu0 0.0
    %85 = vmatpush1.msra.mxu0 0.0
    %86 = vmatprep.subr.mxu0 0.0
    %87 = vmatpush1.msra.mxu0 0.0
    %88 = vmatprep.subr.mxu0 0.0
    %89 = vmatpush1.msra.mxu0 0.0
    %90 = vmatprep.subr.mxu0 0.0
    %91 = vmatpush1.msra.mxu0 0.0
    %92 = vmatprep.subr.mxu0 0.0
    %93 = vmatpush1.msra.mxu0 0.0
    %94 = vmatprep.subr.mxu0 0.0
    %95 = vmatpush1.msra.mxu0 0.0
    %96 = vmatprep.subr.mxu0 0.0
    %97 = vmatpush1.msra.mxu0 0.0
    %98 = vmatprep.subr.mxu0 0.0
    %99 = vmatpush1.msra.mxu0 0.0
    %100 = vmatprep.subr.mxu0 0.0
    %101 = vmatpush1.msra.mxu0 0.0
    %102 = vmatprep.subr.mxu0 0.0
    %103 = vmatpush1.msra.mxu0 0.0
    %104 = vmatprep.subr.mxu0 0.0
    %105 = vmatpush1.msra.mxu0 0.0
    %106 = vmatprep.subr.mxu0 0.0
    %107 = vmatpush1.msra.mxu0 0.0
    %108 = vmatprep.subr.mxu0 0.0
    %109 = vmatpush1.msra.mxu0 0.0
    %110 = vmatprep.subr.mxu0 0.0
    %111 = vmatpush1.msra.mxu0 0.0
    %112 = vmatprep.subr.mxu0 0.0
    %113 = vmatpush1.msra.mxu0 0.0
    %114 = vmatprep.subr.mxu0 0.0
    %115 = vmatpush1.msra.mxu0 0.0
    %116 = vmatprep.subr.mxu0 0.0
    %117 = vmatpush1.msra.mxu0 0.0
    %118 = vmatprep.subr.mxu0 0.0
    %119 = vmatpush1.msra.mxu0 0.0
    %120 = vmatprep.subr.mxu0 0.0
    %121 = vmatpush1.msra.mxu0 0.0
    %122 = vmatprep.subr.mxu0 0.0
    %123 = vmatpush1.msra.mxu0 0.0
    %124 = vmatprep.subr.mxu0 0.0
    %125 = vmatpush1.msra.mxu0 0.0
    %126 = vmatprep.subr.mxu0 0.0
    %127 = vmatpush1.msra.mxu0 0.0
    %128 = vmatprep.subr.mxu0 0.0
    %129 = vmatpush1.msra.mxu0 0.0
    %130 = vmatprep.subr.mxu0 0.0
    %131 = vmatpush1.msra.mxu0 0.0
    %132 = vmatprep.subr.mxu0 0.0
    %133 = vmatpush1.msra.mxu0 0.0
    %134 = vmatprep.subr.mxu0 0.0
    %135 = vmatpush1.msra.mxu0 0.0
    %136 = vmatprep.mubr.f32.mxu0 0.0
    %v137 = vand.u32 %v66, 4294901760
    %v138 = vsub.f32 %v66, %v137
    %v139 = vand.u32 %v138, 4294901760
    %v140 = vsub.f32 %v138, %v139
    %v141 = vand.u32 %v140, 4294901760
    %142 = vmatmul.mubr.f32.gmra.mrb[0].mxu0 %v141
    %v143 = vpop.f32.mrb[0].mxu0
    %v144 = vadd.f32 %v63, %v143
    %v145 = vpop.f32.mrb[0].mxu0
    %146 = vdwg.mxu0
    %147 = vmatprep.subr.mxu0 0.0
    %v148 = vand.u32 %v38, 4294901760
    %v149 = vsub.f32 %v38, %v148
    %v150 = vand.u32 %v149, 4294901760
    %v151 = vsub.f32 %v149, %v150
    %v152 = vand.u32 %v151, 4294901760
    %153 = vmatpush1.msra.mxu0 %v152
    %154 = vmatprep.subr.mxu0 0.0
    %v155 = vand.u32 %v39, 4294901760
    %v156 = vsub.f32 %v39, %v155
    %v157 = vand.u32 %v156, 4294901760
    %v158 = vsub.f32 %v156, %v157
    %v159 = vand.u32 %v158, 4294901760
    %160 = vmatpush1.msra.mxu0 %v159
    %161 = vmatprep.subr.mxu0 0.0
    %v162 = vand.u32 %v40, 4294901760
    %v163 = vsub.f32 %v40, %v162
    %v164 = vand.u32 %v163, 4294901760
    %v165 = vsub.f32 %v163, %v164
    %v166 = vand.u32 %v165, 4294901760
    %167 = vmatpush1.msra.mxu0 %v166
    %168 = vmatprep.subr.mxu0 0.0
    %v169 = vand.u32 %v41, 4294901760
    %v170 = vsub.f32 %v41, %v169
    %v171 = vand.u32 %v170, 4294901760
    %v172 = vsub.f32 %v170, %v171
    %v173 = vand.u32 %v172, 4294901760
    %174 = vmatpush1.msra.mxu0 %v173
    %175 = vmatprep.subr.mxu0 0.0
    %176 = vmatpush1.msra.mxu0 0.0
    %177 = vmatprep.subr.mxu0 0.0
    %178 = vmatpush1.msra.mxu0 0.0
    %179 = vmatprep.subr.mxu0 0.0
    %180 = vmatpush1.msra.mxu0 0.0
    %181 = vmatprep.subr.mxu0 0.0
    %182 = vmatpush1.msra.mxu0 0.0
    %183 = vmatprep.subr.mxu0 0.0
    %184 = vmatpush1.msra.mxu0 0.0
    %185 = vmatprep.subr.mxu0 0.0
    %186 = vmatpush1.msra.mxu0 0.0
    %187 = vmatprep.subr.mxu0 0.0
    %188 = vmatpush1.msra.mxu0 0.0
    %189 = vmatprep.subr.mxu0 0.0
    %190 = vmatpush1.msra.mxu0 0.0
    %191 = vmatprep.subr.mxu0 0.0
    %192 = vmatpush1.msra.mxu0 0.0
    %193 = vmatprep.subr.mxu0 0.0
    %194 = vmatpush1.msra.mxu0 0.0
    %195 = vmatprep.subr.mxu0 0.0
    %196 = vmatpush1.msra.mxu0 0.0
    %197 = vmatprep.subr.mxu0 0.0
    %198 = vmatpush1.msra.mxu0 0.0
    %199 = vmatprep.subr.mxu0 0.0
    %200 = vmatpush1.msra.mxu0 0.0
    %201 = vmatprep.subr.mxu0 0.0
    %202 = vmatpush1.msra.mxu0 0.0
    %203 = vmatprep.subr.mxu0 0.0
    %204 = vmatpush1.msra.mxu0 0.0
    %205 = vmatprep.subr.mxu0 0.0
    %206 = vmatpush1.msra.mxu0 0.0
    %207 = vmatprep.subr.mxu0 0.0
    %208 = vmatpush1.msra.mxu0 0.0
    %209 = vmatprep.subr.mxu0 0.0
    %210 = vmatpush1.msra.mxu0 0.0
    %211 = vmatprep.subr.mxu0 0.0
    %212 = vmatpush1.msra.mxu0 0.0
    %213 = vmatprep.subr.mxu0 0.0
    %214 = vmatpush1.msra.mxu0 0.0
    %215 = vmatprep.subr.mxu0 0.0
    %216 = vmatpush1.msra.mxu0 0.0
    %217 = vmatprep.subr.mxu0 0.0
    %218 = vmatpush1.msra.mxu0 0.0
    %219 = vmatprep.subr.mxu0 0.0
    %220 = vmatpush1.msra.mxu0 0.0
    %221 = vmatprep.subr.mxu0 0.0
    %222 = vmatpush1.msra.mxu0 0.0
    %223 = vmatprep.subr.mxu0 0.0
    %224 = vmatpush1.msra.mxu0 0.0
    %225 = vmatprep.subr.mxu0 0.0
    %226 = vmatpush1.msra.mxu0 0.0
    %227 = vmatprep.subr.mxu0 0.0
    %228 = vmatpush1.msra.mxu0 0.0
    %229 = vmatprep.subr.mxu0 0.0
    %230 = vmatpush1.msra.mxu0 0.0
    %231 = vmatprep.mubr.f32.mxu0 0.0
    %v232 = vand.u32 %v66, 4294901760
    %233 = vmatmul.mubr.f32.gmra.mrb[0].mxu0 %v232
    %v234 = vpop.f32.mrb[0].mxu0
    %v235 = vadd.f32 %v144, %v234
    %v236 = vpop.f32.mrb[0].mxu0
    %237 = vdwg.mxu0
    %238 = vmatprep.subr.mxu0 0.0
    %v239 = vand.u32 %v38, 4294901760
    %v240 = vsub.f32 %v38, %v239
    %241 = vmatpush1.msra.mxu0 %v240
    %242 = vmatprep.subr.mxu0 0.0
    %v243 = vand.u32 %v39, 4294901760
    %v244 = vsub.f32 %v39, %v243
    %245 = vmatpush1.msra.mxu0 %v244
    %246 = vmatprep.subr.mxu0 0.0
    %v247 = vand.u32 %v40, 4294901760
    %v248 = vsub.f32 %v40, %v247
    %249 = vmatpush1.msra.mxu0 %v248
    %250 = vmatprep.subr.mxu0 0.0
    %v251 = vand.u32 %v41, 4294901760
    %v252 = vsub.f32 %v41, %v251
    %253 = vmatpush1.msra.mxu0 %v252
    %254 = vmatprep.subr.mxu0 0.0
    %255 = vmatpush1.msra.mxu0 0.0
    %256 = vmatprep.subr.mxu0 0.0
    %257 = vmatpush1.msra.mxu0 0.0
    %258 = vmatprep.subr.mxu0 0.0
    %259 = vmatpush1.msra.mxu0 0.0
    %260 = vmatprep.subr.mxu0 0.0
    %261 = vmatpush1.msra.mxu0 0.0
    %262 = vmatprep.subr.mxu0 0.0
    %263 = vmatpush1.msra.mxu0 0.0
    %264 = vmatprep.subr.mxu0 0.0
    %265 = vmatpush1.msra.mxu0 0.0
    %266 = vmatprep.subr.mxu0 0.0
    %267 = vmatpush1.msra.mxu0 0.0
    %268 = vmatprep.subr.mxu0 0.0
    %269 = vmatpush1.msra.mxu0 0.0
    %270 = vmatprep.subr.mxu0 0.0
    %271 = vmatpush1.msra.mxu0 0.0
    %272 = vmatprep.subr.mxu0 0.0
    %273 = vmatpush1.msra.mxu0 0.0
    %274 = vmatprep.subr.mxu0 0.0
    %275 = vmatpush1.msra.mxu0 0.0
    %276 = vmatprep.subr.mxu0 0.0
    %277 = vmatpush1.msra.mxu0 0.0
    %278 = vmatprep.subr.mxu0 0.0
    %279 = vmatpush1.msra.mxu0 0.0
    %280 = vmatprep.subr.mxu0 0.0
    %281 = vmatpush1.msra.mxu0 0.0
    %282 = vmatprep.subr.mxu0 0.0
    %283 = vmatpush1.msra.mxu0 0.0
    %284 = vmatprep.subr.mxu0 0.0
    %285 = vmatpush1.msra.mxu0 0.0
    %286 = vmatprep.subr.mxu0 0.0
    %287 = vmatpush1.msra.mxu0 0.0
    %288 = vmatprep.subr.mxu0 0.0
    %289 = vmatpush1.msra.mxu0 0.0
    %290 = vmatprep.subr.mxu0 0.0
    %291 = vmatpush1.msra.mxu0 0.0
    %292 = vmatprep.subr.mxu0 0.0
    %293 = vmatpush1.msra.mxu0 0.0
    %294 = vmatprep.subr.mxu0 0.0
    %295 = vmatpush1.msra.mxu0 0.0
    %296 = vmatprep.subr.mxu0 0.0
    %297 = vmatpush1.msra.mxu0 0.0
    %298 = vmatprep.subr.mxu0 0.0
    %299 = vmatpush1.msra.mxu0 0.0
    %300 = vmatprep.subr.mxu0 0.0
    %301 = vmatpush1.msra.mxu0 0.0
    %302 = vmatprep.subr.mxu0 0.0
    %303 = vmatpush1.msra.mxu0 0.0
    %304 = vmatprep.subr.mxu0 0.0
    %305 = vmatpush1.msra.mxu0 0.0
    %306 = vmatprep.subr.mxu0 0.0
    %307 = vmatpush1.msra.mxu0 0.0
    %308 = vmatprep.subr.mxu0 0.0
    %309 = vmatpush1.msra.mxu0 0.0
    %310 = vmatprep.mubr.f32.mxu0 0.0
    %v311 = vand.u32 %v66, 4294901760
    %v312 = vsub.f32 %v66, %v311
    %313 = vmatmul.mubr.f32.gmra.mrb[0].mxu0 %v312
    %v314 = vpop.f32.mrb[0].mxu0
    %v315 = vadd.f32 %v235, %v314
    %v316 = vpop.f32.mrb[0].mxu0
    %317 = vdwg.mxu0
    %318 = vmatprep.subr.mxu0 0.0
    %v319 = vand.u32 %v38, 4294901760
    %320 = vmatpush1.msra.mxu0 %v319
    %321 = vmatprep.subr.mxu0 0.0
    %v322 = vand.u32 %v39, 4294901760
    %323 = vmatpush1.msra.mxu0 %v322
    %324 = vmatprep.subr.mxu0 0.0
    %v325 = vand.u32 %v40, 4294901760
    %326 = vmatpush1.msra.mxu0 %v325
    %327 = vmatprep.subr.mxu0 0.0
    %v328 = vand.u32 %v41, 4294901760
    %329 = vmatpush1.msra.mxu0 %v328
    %330 = vmatprep.subr.mxu0 0.0
    %331 = vmatpush1.msra.mxu0 0.0
    %332 = vmatprep.subr.mxu0 0.0
    %333 = vmatpush1.msra.mxu0 0.0
    %334 = vmatprep.subr.mxu0 0.0
    %335 = vmatpush1.msra.mxu0 0.0
    %336 = vmatprep.subr.mxu0 0.0
    %337 = vmatpush1.msra.mxu0 0.0
    %338 = vmatprep.subr.mxu0 0.0
    %339 = vmatpush1.msra.mxu0 0.0
    %340 = vmatprep.subr.mxu0 0.0
    %341 = vmatpush1.msra.mxu0 0.0
    %342 = vmatprep.subr.mxu0 0.0
    %343 = vmatpush1.msra.mxu0 0.0
    %344 = vmatprep.subr.mxu0 0.0
    %345 = vmatpush1.msra.mxu0 0.0
    %346 = vmatprep.subr.mxu0 0.0
    %347 = vmatpush1.msra.mxu0 0.0
    %348 = vmatprep.subr.mxu0 0.0
    %349 = vmatpush1.msra.mxu0 0.0
    %350 = vmatprep.subr.mxu0 0.0
    %351 = vmatpush1.msra.mxu0 0.0
    %352 = vmatprep.subr.mxu0 0.0
    %353 = vmatpush1.msra.mxu0 0.0
    %354 = vmatprep.subr.mxu0 0.0
    %355 = vmatpush1.msra.mxu0 0.0
    %356 = vmatprep.subr.mxu0 0.0
    %357 = vmatpush1.msra.mxu0 0.0
    %358 = vmatprep.subr.mxu0 0.0
    %359 = vmatpush1.msra.mxu0 0.0
    %360 = vmatprep.subr.mxu0 0.0
    %361 = vmatpush1.msra.mxu0 0.0
    %362 = vmatprep.subr.mxu0 0.0
    %363 = vmatpush1.msra.mxu0 0.0
    %364 = vmatprep.subr.mxu0 0.0
    %365 = vmatpush1.msra.mxu0 0.0
    %366 = vmatprep.subr.mxu0 0.0
    %367 = vmatpush1.msra.mxu0 0.0
    %368 = vmatprep.subr.mxu0 0.0
    %369 = vmatpush1.msra.mxu0 0.0
    %370 = vmatprep.subr.mxu0 0.0
    %371 = vmatpush1.msra.mxu0 0.0
    %372 = vmatprep.subr.mxu0 0.0
    %373 = vmatpush1.msra.mxu0 0.0
    %374 = vmatprep.subr.mxu0 0.0
    %375 = vmatpush1.msra.mxu0 0.0
    %376 = vmatprep.subr.mxu0 0.0
    %377 = vmatpush1.msra.mxu0 0.0
    %378 = vmatprep.subr.mxu0 0.0
    %379 = vmatpush1.msra.mxu0 0.0
    %380 = vmatprep.subr.mxu0 0.0
    %381 = vmatpush1.msra.mxu0 0.0
    %382 = vmatprep.subr.mxu0 0.0
    %383 = vmatpush1.msra.mxu0 0.0
    %384 = vmatprep.subr.mxu0 0.0
    %385 = vmatpush1.msra.mxu0 0.0
    %386 = vmatprep.mubr.f32.mxu0 0.0
    %v387 = vand.u32 %v66, 4294901760
    %v388 = vsub.f32 %v66, %v387
    %v389 = vand.u32 %v388, 4294901760
    %390 = vmatmul.mubr.f32.gmra.mrb[0].mxu0 %v389
    %v391 = vpop.f32.mrb[0].mxu0
    %v392 = vadd.f32 %v315, %v391
    %v393 = vpop.f32.mrb[0].mxu0
    %394 = vdwg.mxu0
    %395 = vmatprep.subr.mxu0 0.0
    %v396 = vand.u32 %v38, 4294901760
    %v397 = vsub.f32 %v38, %v396
    %v398 = vand.u32 %v397, 4294901760
    %399 = vmatpush1.msra.mxu0 %v398
    %400 = vmatprep.subr.mxu0 0.0
    %v401 = vand.u32 %v39, 4294901760
    %v402 = vsub.f32 %v39, %v401
    %v403 = vand.u32 %v402, 4294901760
    %404 = vmatpush1.msra.mxu0 %v403
    %405 = vmatprep.subr.mxu0 0.0
    %v406 = vand.u32 %v40, 4294901760
    %v407 = vsub.f32 %v40, %v406
    %v408 = vand.u32 %v407, 4294901760
    %409 = vmatpush1.msra.mxu0 %v408
    %410 = vmatprep.subr.mxu0 0.0
    %v411 = vand.u32 %v41, 4294901760
    %v412 = vsub.f32 %v41, %v411
    %v413 = vand.u32 %v412, 4294901760
    %414 = vmatpush1.msra.mxu0 %v413
    %415 = vmatprep.subr.mxu0 0.0
    %416 = vmatpush1.msra.mxu0 0.0
    %417 = vmatprep.subr.mxu0 0.0
    %418 = vmatpush1.msra.mxu0 0.0
    %419 = vmatprep.subr.mxu0 0.0
    %420 = vmatpush1.msra.mxu0 0.0
    %421 = vmatprep.subr.mxu0 0.0
    %422 = vmatpush1.msra.mxu0 0.0
    %423 = vmatprep.subr.mxu0 0.0
    %424 = vmatpush1.msra.mxu0 0.0
    %425 = vmatprep.subr.mxu0 0.0
    %426 = vmatpush1.msra.mxu0 0.0
    %427 = vmatprep.subr.mxu0 0.0
    %428 = vmatpush1.msra.mxu0 0.0
    %429 = vmatprep.subr.mxu0 0.0
    %430 = vmatpush1.msra.mxu0 0.0
    %431 = vmatprep.subr.mxu0 0.0
    %432 = vmatpush1.msra.mxu0 0.0
    %433 = vmatprep.subr.mxu0 0.0
    %434 = vmatpush1.msra.mxu0 0.0
    %435 = vmatprep.subr.mxu0 0.0
    %436 = vmatpush1.msra.mxu0 0.0
    %437 = vmatprep.subr.mxu0 0.0
    %438 = vmatpush1.msra.mxu0 0.0
    %439 = vmatprep.subr.mxu0 0.0
    %440 = vmatpush1.msra.mxu0 0.0
    %441 = vmatprep.subr.mxu0 0.0
    %442 = vmatpush1.msra.mxu0 0.0
    %443 = vmatprep.subr.mxu0 0.0
    %444 = vmatpush1.msra.mxu0 0.0
    %445 = vmatprep.subr.mxu0 0.0
    %446 = vmatpush1.msra.mxu0 0.0
    %447 = vmatprep.subr.mxu0 0.0
    %448 = vmatpush1.msra.mxu0 0.0
    %449 = vmatprep.subr.mxu0 0.0
    %450 = vmatpush1.msra.mxu0 0.0
    %451 = vmatprep.subr.mxu0 0.0
    %452 = vmatpush1.msra.mxu0 0.0
    %453 = vmatprep.subr.mxu0 0.0
    %454 = vmatpush1.msra.mxu0 0.0
    %455 = vmatprep.subr.mxu0 0.0
    %456 = vmatpush1.msra.mxu0 0.0
    %457 = vmatprep.subr.mxu0 0.0
    %458 = vmatpush1.msra.mxu0 0.0
    %459 = vmatprep.subr.mxu0 0.0
    %460 = vmatpush1.msra.mxu0 0.0
    %461 = vmatprep.subr.mxu0 0.0
    %462 = vmatpush1.msra.mxu0 0.0
    %463 = vmatprep.subr.mxu0 0.0
    %464 = vmatpush1.msra.mxu0 0.0
    %465 = vmatprep.subr.mxu0 0.0
    %466 = vmatpush1.msra.mxu0 0.0
    %467 = vmatprep.subr.mxu0 0.0
    %468 = vmatpush1.msra.mxu0 0.0
    %469 = vmatprep.subr.mxu0 0.0
    %470 = vmatpush1.msra.mxu0 0.0
    %471 = vmatprep.mubr.f32.mxu0 0.0
    %v472 = vand.u32 %v66, 4294901760
    %473 = vmatmul.mubr.f32.gmra.mrb[0].mxu0 %v472
    %v474 = vpop.f32.mrb[0].mxu0
    %v475 = vadd.f32 %v392, %v474
    %v476 = vpop.f32.mrb[0].mxu0
    %477 = vdwg.mxu0
    %478 = vmatprep.subr.mxu0 0.0
    %v479 = vand.u32 %v38, 4294901760
    %480 = vmatpush1.msra.mxu0 %v479
    %481 = vmatprep.subr.mxu0 0.0
    %v482 = vand.u32 %v39, 4294901760
    %483 = vmatpush1.msra.mxu0 %v482
    %484 = vmatprep.subr.mxu0 0.0
    %v485 = vand.u32 %v40, 4294901760
    %486 = vmatpush1.msra.mxu0 %v485
    %487 = vmatprep.subr.mxu0 0.0
    %v488 = vand.u32 %v41, 4294901760
    %489 = vmatpush1.msra.mxu0 %v488
    %490 = vmatprep.subr.mxu0 0.0
    %491 = vmatpush1.msra.mxu0 0.0
    %492 = vmatprep.subr.mxu0 0.0
    %493 = vmatpush1.msra.mxu0 0.0
    %494 = vmatprep.subr.mxu0 0.0
    %495 = vmatpush1.msra.mxu0 0.0
    %496 = vmatprep.subr.mxu0 0.0
    %497 = vmatpush1.msra.mxu0 0.0
    %498 = vmatprep.subr.mxu0 0.0
    %499 = vmatpush1.msra.mxu0 0.0
    %500 = vmatprep.subr.mxu0 0.0
    %501 = vmatpush1.msra.mxu0 0.0
    %502 = vmatprep.subr.mxu0 0.0
    %503 = vmatpush1.msra.mxu0 0.0
    %504 = vmatprep.subr.mxu0 0.0
    %505 = vmatpush1.msra.mxu0 0.0
    %506 = vmatprep.subr.mxu0 0.0
    %507 = vmatpush1.msra.mxu0 0.0
    %508 = vmatprep.subr.mxu0 0.0
    %509 = vmatpush1.msra.mxu0 0.0
    %510 = vmatprep.subr.mxu0 0.0
    %511 = vmatpush1.msra.mxu0 0.0
    %512 = vmatprep.subr.mxu0 0.0
    %513 = vmatpush1.msra.mxu0 0.0
    %514 = vmatprep.subr.mxu0 0.0
    %515 = vmatpush1.msra.mxu0 0.0
    %516 = vmatprep.subr.mxu0 0.0
    %517 = vmatpush1.msra.mxu0 0.0
    %518 = vmatprep.subr.mxu0 0.0
    %519 = vmatpush1.msra.mxu0 0.0
    %520 = vmatprep.subr.mxu0 0.0
    %521 = vmatpush1.msra.mxu0 0.0
    %522 = vmatprep.subr.mxu0 0.0
    %523 = vmatpush1.msra.mxu0 0.0
    %524 = vmatprep.subr.mxu0 0.0
    %525 = vmatpush1.msra.mxu0 0.0
    %526 = vmatprep.subr.mxu0 0.0
    %527 = vmatpush1.msra.mxu0 0.0
    %528 = vmatprep.subr.mxu0 0.0
    %529 = vmatpush1.msra.mxu0 0.0
    %530 = vmatprep.subr.mxu0 0.0
    %531 = vmatpush1.msra.mxu0 0.0
    %532 = vmatprep.subr.mxu0 0.0
    %533 = vmatpush1.msra.mxu0 0.0
    %534 = vmatprep.subr.mxu0 0.0
    %535 = vmatpush1.msra.mxu0 0.0
    %536 = vmatprep.subr.mxu0 0.0
    %537 = vmatpush1.msra.mxu0 0.0
    %538 = vmatprep.subr.mxu0 0.0
    %539 = vmatpush1.msra.mxu0 0.0
    %540 = vmatprep.subr.mxu0 0.0
    %541 = vmatpush1.msra.mxu0 0.0
    %542 = vmatprep.subr.mxu0 0.0
    %543 = vmatpush1.msra.mxu0 0.0
    %544 = vmatprep.subr.mxu0 0.0
    %545 = vmatpush1.msra.mxu0 0.0
    %546 = vmatprep.mubr.f32.mxu0 0.0
    %v547 = vand.u32 %v66, 4294901760
    %548 = vmatmul.mubr.f32.gmra.mrb[0].mxu0 %v547
    %v549 = vpop.f32.mrb[0].mxu0
    %v550 = vadd.f32 %v475, %v549
    %v551 = vpop.f32.mrb[0].mxu0
    %552 = vdwg.mxu0
    %v553 = vmax.f32 %v550, 0.0
    %v554 = vlaneseq
    %v555 = vshrl.u32 %v554, 7
    %v556 = vsub.s32 0, %v555
    %v557 = vrot.slane %v59, %v556
    %558 = vmatprep.subr.mxu0 0.0
    %v559 = vand.u32 %v43, 4294901760
    %560 = vmatpush1.msra.mxu0 %v559
    %561 = vmatprep.subr.mxu0 0.0
    %v562 = vand.u32 %v44, 4294901760
    %563 = vmatpush1.msra.mxu0 %v562
    %564 = vmatprep.subr.mxu0 0.0
    %v565 = vand.u32 %v45, 4294901760
    %566 = vmatpush1.msra.mxu0 %v565
    %567 = vmatprep.subr.mxu0 0.0
    %v568 = vand.u32 %v46, 4294901760
    %569 = vmatpush1.msra.mxu0 %v568
    %570 = vmatprep.subr.mxu0 0.0
    %v571 = vand.u32 %v47, 4294901760
    %572 = vmatpush1.msra.mxu0 %v571
    %573 = vmatprep.subr.mxu0 0.0
    %v574 = vand.u32 %v48, 4294901760
    %575 = vmatpush1.msra.mxu0 %v574
    %576 = vmatprep.subr.mxu0 0.0
    %v577 = vand.u32 %v49, 4294901760
    %578 = vmatpush1.msra.mxu0 %v577
    %579 = vmatprep.subr.mxu0 0.0
    %v580 = vand.u32 %v50, 4294901760
    %581 = vmatpush1.msra.mxu0 %v580
    %582 = vmatprep.subr.mxu0 0.0
    %v583 = vand.u32 %v51, 4294901760
    %584 = vmatpush1.msra.mxu0 %v583
    %585 = vmatprep.subr.mxu0 0.0
    %v586 = vand.u32 %v52, 4294901760
    %587 = vmatpush1.msra.mxu0 %v586
    %588 = vmatprep.subr.mxu0 0.0
    %v589 = vand.u32 %v53, 4294901760
    %590 = vmatpush1.msra.mxu0 %v589
    %591 = vmatprep.subr.mxu0 0.0
    %v592 = vand.u32 %v54, 4294901760
    %593 = vmatpush1.msra.mxu0 %v592
    %594 = vmatprep.subr.mxu0 0.0
    %v595 = vand.u32 %v55, 4294901760
    %596 = vmatpush1.msra.mxu0 %v595
    %597 = vmatprep.subr.mxu0 0.0
    %v598 = vand.u32 %v56, 4294901760
    %599 = vmatpush1.msra.mxu0 %v598
    %600 = vmatprep.subr.mxu0 0.0
    %v601 = vand.u32 %v57, 4294901760
    %602 = vmatpush1.msra.mxu0 %v601
    %603 = vmatprep.subr.mxu0 0.0
    %v604 = vand.u32 %v58, 4294901760
    %605 = vmatpush1.msra.mxu0 %v604
    %606 = vmatprep.subr.mxu0 0.0
    %607 = vmatpush1.msra.mxu0 0.0
    %608 = vmatprep.subr.mxu0 0.0
    %609 = vmatpush1.msra.mxu0 0.0
    %610 = vmatprep.subr.mxu0 0.0
    %611 = vmatpush1.msra.mxu0 0.0
    %612 = vmatprep.subr.mxu0 0.0
    %613 = vmatpush1.msra.mxu0 0.0
    %614 = vmatprep.subr.mxu0 0.0
    %615 = vmatpush1.msra.mxu0 0.0
    %616 = vmatprep.subr.mxu0 0.0
    %617 = vmatpush1.msra.mxu0 0.0
    %618 = vmatprep.subr.mxu0 0.0
    %619 = vmatpush1.msra.mxu0 0.0
    %620 = vmatprep.subr.mxu0 0.0
    %621 = vmatpush1.msra.mxu0 0.0
    %622 = vmatprep.subr.mxu0 0.0
    %623 = vmatpush1.msra.mxu0 0.0
    %624 = vmatprep.subr.mxu0 0.0
    %625 = vmatpush1.msra.mxu0 0.0
    %626 = vmatprep.subr.mxu0 0.0
    %627 = vmatpush1.msra.mxu0 0.0
    %628 = vmatprep.subr.mxu0 0.0
    %629 = vmatpush1.msra.mxu0 0.0
    %630 = vmatprep.subr.mxu0 0.0
    %631 = vmatpush1.msra.mxu0 0.0
    %632 = vmatprep.subr.mxu0 0.0
    %633 = vmatpush1.msra.mxu0 0.0
    %634 = vmatprep.subr.mxu0 0.0
    %635 = vmatpush1.msra.mxu0 0.0
    %636 = vmatprep.subr.mxu0 0.0
    %637 = vmatpush1.msra.mxu0 0.0
    %638 = vmatprep.mubr.f32.mxu0 0.0
    %v639 = vand.u32 %v553, 4294901760
    %v640 = vsub.f32 %v553, %v639
    %v641 = vand.u32 %v640, 4294901760
    %v642 = vsub.f32 %v640, %v641
    %v643 = vand.u32 %v642, 4294901760
    %644 = vmatmul.mubr.f32.gmra.mrb[0].mxu0 %v643
    %v645 = vpop.f32.mrb[0].mxu0
    %v646 = vadd.f32 %v557, %v645
    %v647 = vpop.f32.mrb[0].mxu0
    %648 = vdwg.mxu0
    %649 = vmatprep.subr.mxu0 0.0
    %v650 = vand.u32 %v43, 4294901760
    %v651 = vsub.f32 %v43, %v650
    %v652 = vand.u32 %v651, 4294901760
    %v653 = vsub.f32 %v651, %v652
    %v654 = vand.u32 %v653, 4294901760
    %655 = vmatpush1.msra.mxu0 %v654
    %656 = vmatprep.subr.mxu0 0.0
    %v657 = vand.u32 %v44, 4294901760
    %v658 = vsub.f32 %v44, %v657
    %v659 = vand.u32 %v658, 4294901760
    %v660 = vsub.f32 %v658, %v659
    %v661 = vand.u32 %v660, 4294901760
    %662 = vmatpush1.msra.mxu0 %v661
    %663 = vmatprep.subr.mxu0 0.0
    %v664 = vand.u32 %v45, 4294901760
    %v665 = vsub.f32 %v45, %v664
    %v666 = vand.u32 %v665, 4294901760
    %v667 = vsub.f32 %v665, %v666
    %v668 = vand.u32 %v667, 4294901760
    %669 = vmatpush1.msra.mxu0 %v668
    %670 = vmatprep.subr.mxu0 0.0
    %v671 = vand.u32 %v46, 4294901760
    %v672 = vsub.f32 %v46, %v671
    %v673 = vand.u32 %v672, 4294901760
    %v674 = vsub.f32 %v672, %v673
    %v675 = vand.u32 %v674, 4294901760
    %676 = vmatpush1.msra.mxu0 %v675
    %677 = vmatprep.subr.mxu0 0.0
    %v678 = vand.u32 %v47, 4294901760
    %v679 = vsub.f32 %v47, %v678
    %v680 = vand.u32 %v679, 4294901760
    %v681 = vsub.f32 %v679, %v680
    %v682 = vand.u32 %v681, 4294901760
    %683 = vmatpush1.msra.mxu0 %v682
    %684 = vmatprep.subr.mxu0 0.0
    %v685 = vand.u32 %v48, 4294901760
    %v686 = vsub.f32 %v48, %v685
    %v687 = vand.u32 %v686, 4294901760
    %v688 = vsub.f32 %v686, %v687
    %v689 = vand.u32 %v688, 4294901760
    %690 = vmatpush1.msra.mxu0 %v689
    %691 = vmatprep.subr.mxu0 0.0
    %v692 = vand.u32 %v49, 4294901760
    %v693 = vsub.f32 %v49, %v692
    %v694 = vand.u32 %v693, 4294901760
    %v695 = vsub.f32 %v693, %v694
    %v696 = vand.u32 %v695, 4294901760
    %697 = vmatpush1.msra.mxu0 %v696
    %698 = vmatprep.subr.mxu0 0.0
    %v699 = vand.u32 %v50, 4294901760
    %v700 = vsub.f32 %v50, %v699
    %v701 = vand.u32 %v700, 4294901760
    %v702 = vsub.f32 %v700, %v701
    %v703 = vand.u32 %v702, 4294901760
    %704 = vmatpush1.msra.mxu0 %v703
    %705 = vmatprep.subr.mxu0 0.0
    %v706 = vand.u32 %v51, 4294901760
    %v707 = vsub.f32 %v51, %v706
    %v708 = vand.u32 %v707, 4294901760
    %v709 = vsub.f32 %v707, %v708
    %v710 = vand.u32 %v709, 4294901760
    %711 = vmatpush1.msra.mxu0 %v710
    %712 = vmatprep.subr.mxu0 0.0
    %v713 = vand.u32 %v52, 4294901760
    %v714 = vsub.f32 %v52, %v713
    %v715 = vand.u32 %v714, 4294901760
    %v716 = vsub.f32 %v714, %v715
    %v717 = vand.u32 %v716, 4294901760
    %718 = vmatpush1.msra.mxu0 %v717
    %719 = vmatprep.subr.mxu0 0.0
    %v720 = vand.u32 %v53, 4294901760
    %v721 = vsub.f32 %v53, %v720
    %v722 = vand.u32 %v721, 4294901760
    %v723 = vsub.f32 %v721, %v722
    %v724 = vand.u32 %v723, 4294901760
    %725 = vmatpush1.msra.mxu0 %v724
    %726 = vmatprep.subr.mxu0 0.0
    %v727 = vand.u32 %v54, 4294901760
    %v728 = vsub.f32 %v54, %v727
    %v729 = vand.u32 %v728, 4294901760
    %v730 = vsub.f32 %v728, %v729
    %v731 = vand.u32 %v730, 4294901760
    %732 = vmatpush1.msra.mxu0 %v731
    %733 = vmatprep.subr.mxu0 0.0
    %v734 = vand.u32 %v55, 4294901760
    %v735 = vsub.f32 %v55, %v734
    %v736 = vand.u32 %v735, 4294901760
    %v737 = vsub.f32 %v735, %v736
    %v738 = vand.u32 %v737, 4294901760
    %739 = vmatpush1.msra.mxu0 %v738
    %740 = vmatprep.subr.mxu0 0.0
    %v741 = vand.u32 %v56, 4294901760
    %v742 = vsub.f32 %v56, %v741
    %v743 = vand.u32 %v742, 4294901760
    %v744 = vsub.f32 %v742, %v743
    %v745 = vand.u32 %v744, 4294901760
    %746 = vmatpush1.msra.mxu0 %v745
    %747 = vmatprep.subr.mxu0 0.0
    %v748 = vand.u32 %v57, 4294901760
    %v749 = vsub.f32 %v57, %v748
    %v750 = vand.u32 %v749, 4294901760
    %v751 = vsub.f32 %v749, %v750
    %v752 = vand.u32 %v751, 4294901760
    %753 = vmatpush1.msra.mxu0 %v752
    %754 = vmatprep.subr.mxu0 0.0
    %v755 = vand.u32 %v58, 4294901760
    %v756 = vsub.f32 %v58, %v755
    %v757 = vand.u32 %v756, 4294901760
    %v758 = vsub.f32 %v756, %v757
    %v759 = vand.u32 %v758, 4294901760
    %760 = vmatpush1.msra.mxu0 %v759
    %761 = vmatprep.subr.mxu0 0.0
    %762 = vmatpush1.msra.mxu0 0.0
    %763 = vmatprep.subr.mxu0 0.0
    %764 = vmatpush1.msra.mxu0 0.0
    %765 = vmatprep.subr.mxu0 0.0
    %766 = vmatpush1.msra.mxu0 0.0
    %767 = vmatprep.subr.mxu0 0.0
    %768 = vmatpush1.msra.mxu0 0.0
    %769 = vmatprep.subr.mxu0 0.0
    %770 = vmatpush1.msra.mxu0 0.0
    %771 = vmatprep.subr.mxu0 0.0
    %772 = vmatpush1.msra.mxu0 0.0
    %773 = vmatprep.subr.mxu0 0.0
    %774 = vmatpush1.msra.mxu0 0.0
    %775 = vmatprep.subr.mxu0 0.0
    %776 = vmatpush1.msra.mxu0 0.0
    %777 = vmatprep.subr.mxu0 0.0
    %778 = vmatpush1.msra.mxu0 0.0
    %779 = vmatprep.subr.mxu0 0.0
    %780 = vmatpush1.msra.mxu0 0.0
    %781 = vmatprep.subr.mxu0 0.0
    %782 = vmatpush1.msra.mxu0 0.0
    %783 = vmatprep.subr.mxu0 0.0
    %784 = vmatpush1.msra.mxu0 0.0
    %785 = vmatprep.subr.mxu0 0.0
    %786 = vmatpush1.msra.mxu0 0.0
    %787 = vmatprep.subr.mxu0 0.0
    %788 = vmatpush1.msra.mxu0 0.0
    %789 = vmatprep.subr.mxu0 0.0
    %790 = vmatpush1.msra.mxu0 0.0
    %791 = vmatprep.subr.mxu0 0.0
    %792 = vmatpush1.msra.mxu0 0.0
    %793 = vmatprep.mubr.f32.mxu0 0.0
    %v794 = vand.u32 %v553, 4294901760
    %795 = vmatmul.mubr.f32.gmra.mrb[0].mxu0 %v794
    %v796 = vpop.f32.mrb[0].mxu0
    %v797 = vadd.f32 %v646, %v796
    %v798 = vpop.f32.mrb[0].mxu0
    %799 = vdwg.mxu0
    %800 = vmatprep.subr.mxu0 0.0
    %v801 = vand.u32 %v43, 4294901760
    %v802 = vsub.f32 %v43, %v801
    %803 = vmatpush1.msra.mxu0 %v802
    %804 = vmatprep.subr.mxu0 0.0
    %v805 = vand.u32 %v44, 4294901760
    %v806 = vsub.f32 %v44, %v805
    %807 = vmatpush1.msra.mxu0 %v806
    %808 = vmatprep.subr.mxu0 0.0
    %v809 = vand.u32 %v45, 4294901760
    %v810 = vsub.f32 %v45, %v809
    %811 = vmatpush1.msra.mxu0 %v810
    %812 = vmatprep.subr.mxu0 0.0
    %v813 = vand.u32 %v46, 4294901760
    %v814 = vsub.f32 %v46, %v813
    %815 = vmatpush1.msra.mxu0 %v814
    %816 = vmatprep.subr.mxu0 0.0
    %v817 = vand.u32 %v47, 4294901760
    %v818 = vsub.f32 %v47, %v817
    %819 = vmatpush1.msra.mxu0 %v818
    %820 = vmatprep.subr.mxu0 0.0
    %v821 = vand.u32 %v48, 4294901760
    %v822 = vsub.f32 %v48, %v821
    %823 = vmatpush1.msra.mxu0 %v822
    %824 = vmatprep.subr.mxu0 0.0
    %v825 = vand.u32 %v49, 4294901760
    %v826 = vsub.f32 %v49, %v825
    %827 = vmatpush1.msra.mxu0 %v826
    %828 = vmatprep.subr.mxu0 0.0
    %v829 = vand.u32 %v50, 4294901760
    %v830 = vsub.f32 %v50, %v829
    %831 = vmatpush1.msra.mxu0 %v830
    %832 = vmatprep.subr.mxu0 0.0
    %v833 = vand.u32 %v51, 4294901760
    %v834 = vsub.f32 %v51, %v833
    %835 = vmatpush1.msra.mxu0 %v834
    %836 = vmatprep.subr.mxu0 0.0
    %v837 = vand.u32 %v52, 4294901760
    %v838 = vsub.f32 %v52, %v837
    %839 = vmatpush1.msra.mxu0 %v838
    %840 = vmatprep.subr.mxu0 0.0
    %v841 = vand.u32 %v53, 4294901760
    %v842 = vsub.f32 %v53, %v841
    %843 = vmatpush1.msra.mxu0 %v842
    %844 = vmatprep.subr.mxu0 0.0
    %v845 = vand.u32 %v54, 4294901760
    %v846 = vsub.f32 %v54, %v845
    %847 = vmatpush1.msra.mxu0 %v846
    %848 = vmatprep.subr.mxu0 0.0
    %v849 = vand.u32 %v55, 4294901760
    %v850 = vsub.f32 %v55, %v849
    %851 = vmatpush1.msra.mxu0 %v850
    %852 = vmatprep.subr.mxu0 0.0
    %v853 = vand.u32 %v56, 4294901760
    %v854 = vsub.f32 %v56, %v853
    %855 = vmatpush1.msra.mxu0 %v854
    %856 = vmatprep.subr.mxu0 0.0
    %v857 = vand.u32 %v57, 4294901760
    %v858 = vsub.f32 %v57, %v857
    %859 = vmatpush1.msra.mxu0 %v858
    %860 = vmatprep.subr.mxu0 0.0
    %v861 = vand.u32 %v58, 4294901760
    %v862 = vsub.f32 %v58, %v861
    %863 = vmatpush1.msra.mxu0 %v862
    %864 = vmatprep.subr.mxu0 0.0
    %865 = vmatpush1.msra.mxu0 0.0
    %866 = vmatprep.subr.mxu0 0.0
    %867 = vmatpush1.msra.mxu0 0.0
    %868 = vmatprep.subr.mxu0 0.0
    %869 = vmatpush1.msra.mxu0 0.0
    %870 = vmatprep.subr.mxu0 0.0
    %871 = vmatpush1.msra.mxu0 0.0
    %872 = vmatprep.subr.mxu0 0.0
    %873 = vmatpush1.msra.mxu0 0.0
    %874 = vmatprep.subr.mxu0 0.0
    %875 = vmatpush1.msra.mxu0 0.0
    %876 = vmatprep.subr.mxu0 0.0
    %877 = vmatpush1.msra.mxu0 0.0
    %878 = vmatprep.subr.mxu0 0.0
    %879 = vmatpush1.msra.mxu0 0.0
    %880 = vmatprep.subr.mxu0 0.0
    %881 = vmatpush1.msra.mxu0 0.0
    %882 = vmatprep.subr.mxu0 0.0
    %883 = vmatpush1.msra.mxu0 0.0
    %884 = vmatprep.subr.mxu0 0.0
    %885 = vmatpush1.msra.mxu0 0.0
    %886 = vmatprep.subr.mxu0 0.0
    %887 = vmatpush1.msra.mxu0 0.0
    %888 = vmatprep.subr.mxu0 0.0
    %889 = vmatpush1.msra.mxu0 0.0
    %890 = vmatprep.subr.mxu0 0.0
    %891 = vmatpush1.msra.mxu0 0.0
    %892 = vmatprep.subr.mxu0 0.0
    %893 = vmatpush1.msra.mxu0 0.0
    %894 = vmatprep.subr.mxu0 0.0
    %895 = vmatpush1.msra.mxu0 0.0
    %896 = vmatprep.mubr.f32.mxu0 0.0
    %v897 = vand.u32 %v553, 4294901760
    %v898 = vsub.f32 %v553, %v897
    %899 = vmatmul.mubr.f32.gmra.mrb[0].mxu0 %v898
    %v900 = vpop.f32.mrb[0].mxu0
    %v901 = vadd.f32 %v797, %v900
    %v902 = vpop.f32.mrb[0].mxu0
    %903 = vdwg.mxu0
    %904 = vmatprep.subr.mxu0 0.0
    %v905 = vand.u32 %v43, 4294901760
    %906 = vmatpush1.msra.mxu0 %v905
    %907 = vmatprep.subr.mxu0 0.0
    %v908 = vand.u32 %v44, 4294901760
    %909 = vmatpush1.msra.mxu0 %v908
    %910 = vmatprep.subr.mxu0 0.0
    %v911 = vand.u32 %v45, 4294901760
    %912 = vmatpush1.msra.mxu0 %v911
    %913 = vmatprep.subr.mxu0 0.0
    %v914 = vand.u32 %v46, 4294901760
    %915 = vmatpush1.msra.mxu0 %v914
    %916 = vmatprep.subr.mxu0 0.0
    %v917 = vand.u32 %v47, 4294901760
    %918 = vmatpush1.msra.mxu0 %v917
    %919 = vmatprep.subr.mxu0 0.0
    %v920 = vand.u32 %v48, 4294901760
    %921 = vmatpush1.msra.mxu0 %v920
    %922 = vmatprep.subr.mxu0 0.0
    %v923 = vand.u32 %v49, 4294901760
    %924 = vmatpush1.msra.mxu0 %v923
    %925 = vmatprep.subr.mxu0 0.0
    %v926 = vand.u32 %v50, 4294901760
    %927 = vmatpush1.msra.mxu0 %v926
    %928 = vmatprep.subr.mxu0 0.0
    %v929 = vand.u32 %v51, 4294901760
    %930 = vmatpush1.msra.mxu0 %v929
    %931 = vmatprep.subr.mxu0 0.0
    %v932 = vand.u32 %v52, 4294901760
    %933 = vmatpush1.msra.mxu0 %v932
    %934 = vmatprep.subr.mxu0 0.0
    %v935 = vand.u32 %v53, 4294901760
    %936 = vmatpush1.msra.mxu0 %v935
    %937 = vmatprep.subr.mxu0 0.0
    %v938 = vand.u32 %v54, 4294901760
    %939 = vmatpush1.msra.mxu0 %v938
    %940 = vmatprep.subr.mxu0 0.0
    %v941 = vand.u32 %v55, 4294901760
    %942 = vmatpush1.msra.mxu0 %v941
    %943 = vmatprep.subr.mxu0 0.0
    %v944 = vand.u32 %v56, 4294901760
    %945 = vmatpush1.msra.mxu0 %v944
    %946 = vmatprep.subr.mxu0 0.0
    %v947 = vand.u32 %v57, 4294901760
    %948 = vmatpush1.msra.mxu0 %v947
    %949 = vmatprep.subr.mxu0 0.0
    %v950 = vand.u32 %v58, 4294901760
    %951 = vmatpush1.msra.mxu0 %v950
    %952 = vmatprep.subr.mxu0 0.0
    %953 = vmatpush1.msra.mxu0 0.0
    %954 = vmatprep.subr.mxu0 0.0
    %955 = vmatpush1.msra.mxu0 0.0
    %956 = vmatprep.subr.mxu0 0.0
    %957 = vmatpush1.msra.mxu0 0.0
    %958 = vmatprep.subr.mxu0 0.0
    %959 = vmatpush1.msra.mxu0 0.0
    %960 = vmatprep.subr.mxu0 0.0
    %961 = vmatpush1.msra.mxu0 0.0
    %962 = vmatprep.subr.mxu0 0.0
    %963 = vmatpush1.msra.mxu0 0.0
    %964 = vmatprep.subr.mxu0 0.0
    %965 = vmatpush1.msra.mxu0 0.0
    %966 = vmatprep.subr.mxu0 0.0
    %967 = vmatpush1.msra.mxu0 0.0
    %968 = vmatprep.subr.mxu0 0.0
    %969 = vmatpush1.msra.mxu0 0.0
    %970 = vmatprep.subr.mxu0 0.0
    %971 = vmatpush1.msra.mxu0 0.0
    %972 = vmatprep.subr.mxu0 0.0
    %973 = vmatpush1.msra.mxu0 0.0
    %974 = vmatprep.subr.mxu0 0.0
    %975 = vmatpush1.msra.mxu0 0.0
    %976 = vmatprep.subr.mxu0 0.0
    %977 = vmatpush1.msra.mxu0 0.0
    %978 = vmatprep.subr.mxu0 0.0
    %979 = vmatpush1.msra.mxu0 0.0
    %980 = vmatprep.subr.mxu0 0.0
    %981 = vmatpush1.msra.mxu0 0.0
    %982 = vmatprep.subr.mxu0 0.0
    %983 = vmatpush1.msra.mxu0 0.0
    %984 = vmatprep.mubr.f32.mxu0 0.0
    %v985 = vand.u32 %v553, 4294901760
    %v986 = vsub.f32 %v553, %v985
    %v987 = vand.u32 %v986, 4294901760
    %988 = vmatmul.mubr.f32.gmra.mrb[0].mxu0 %v987
    %v989 = vpop.f32.mrb[0].mxu0
    %v990 = vadd.f32 %v901, %v989
    %v991 = vpop.f32.mrb[0].mxu0
    %992 = vdwg.mxu0
    %993 = vmatprep.subr.mxu0 0.0
    %v994 = vand.u32 %v43, 4294901760
    %v995 = vsub.f32 %v43, %v994
    %v996 = vand.u32 %v995, 4294901760
    %997 = vmatpush1.msra.mxu0 %v996
    %998 = vmatprep.subr.mxu0 0.0
    %v999 = vand.u32 %v44, 4294901760
    %v1000 = vsub.f32 %v44, %v999
    %v1001 = vand.u32 %v1000, 4294901760
    %1002 = vmatpush1.msra.mxu0 %v1001
    %1003 = vmatprep.subr.mxu0 0.0
    %v1004 = vand.u32 %v45, 4294901760
    %v1005 = vsub.f32 %v45, %v1004
    %v1006 = vand.u32 %v1005, 4294901760
    %1007 = vmatpush1.msra.mxu0 %v1006
    %1008 = vmatprep.subr.mxu0 0.0
    %v1009 = vand.u32 %v46, 4294901760
    %v1010 = vsub.f32 %v46, %v1009
    %v1011 = vand.u32 %v1010, 4294901760
    %1012 = vmatpush1.msra.mxu0 %v1011
    %1013 = vmatprep.subr.mxu0 0.0
    %v1014 = vand.u32 %v47, 4294901760
    %v1015 = vsub.f32 %v47, %v1014
    %v1016 = vand.u32 %v1015, 4294901760
    %1017 = vmatpush1.msra.mxu0 %v1016
    %1018 = vmatprep.subr.mxu0 0.0
    %v1019 = vand.u32 %v48, 4294901760
    %v1020 = vsub.f32 %v48, %v1019
    %v1021 = vand.u32 %v1020, 4294901760
    %1022 = vmatpush1.msra.mxu0 %v1021
    %1023 = vmatprep.subr.mxu0 0.0
    %v1024 = vand.u32 %v49, 4294901760
    %v1025 = vsub.f32 %v49, %v1024
    %v1026 = vand.u32 %v1025, 4294901760
    %1027 = vmatpush1.msra.mxu0 %v1026
    %1028 = vmatprep.subr.mxu0 0.0
    %v1029 = vand.u32 %v50, 4294901760
    %v1030 = vsub.f32 %v50, %v1029
    %v1031 = vand.u32 %v1030, 4294901760
    %1032 = vmatpush1.msra.mxu0 %v1031
    %1033 = vmatprep.subr.mxu0 0.0
    %v1034 = vand.u32 %v51, 4294901760
    %v1035 = vsub.f32 %v51, %v1034
    %v1036 = vand.u32 %v1035, 4294901760
    %1037 = vmatpush1.msra.mxu0 %v1036
    %1038 = vmatprep.subr.mxu0 0.0
    %v1039 = vand.u32 %v52, 4294901760
    %v1040 = vsub.f32 %v52, %v1039
    %v1041 = vand.u32 %v1040, 4294901760
    %1042 = vmatpush1.msra.mxu0 %v1041
    %1043 = vmatprep.subr.mxu0 0.0
    %v1044 = vand.u32 %v53, 4294901760
    %v1045 = vsub.f32 %v53, %v1044
    %v1046 = vand.u32 %v1045, 4294901760
    %1047 = vmatpush1.msra.mxu0 %v1046
    %1048 = vmatprep.subr.mxu0 0.0
    %v1049 = vand.u32 %v54, 4294901760
    %v1050 = vsub.f32 %v54, %v1049
    %v1051 = vand.u32 %v1050, 4294901760
    %1052 = vmatpush1.msra.mxu0 %v1051
    %1053 = vmatprep.subr.mxu0 0.0
    %v1054 = vand.u32 %v55, 4294901760
    %v1055 = vsub.f32 %v55, %v1054
    %v1056 = vand.u32 %v1055, 4294901760
    %1057 = vmatpush1.msra.mxu0 %v1056
    %1058 = vmatprep.subr.mxu0 0.0
    %v1059 = vand.u32 %v56, 4294901760
    %v1060 = vsub.f32 %v56, %v1059
    %v1061 = vand.u32 %v1060, 4294901760
    %1062 = vmatpush1.msra.mxu0 %v1061
    %1063 = vmatprep.subr.mxu0 0.0
    %v1064 = vand.u32 %v57, 4294901760
    %v1065 = vsub.f32 %v57, %v1064
    %v1066 = vand.u32 %v1065, 4294901760
    %1067 = vmatpush1.msra.mxu0 %v1066
    %1068 = vmatprep.subr.mxu0 0.0
    %v1069 = vand.u32 %v58, 4294901760
    %v1070 = vsub.f32 %v58, %v1069
    %v1071 = vand.u32 %v1070, 4294901760
    %1072 = vmatpush1.msra.mxu0 %v1071
    %1073 = vmatprep.subr.mxu0 0.0
    %1074 = vmatpush1.msra.mxu0 0.0
    %1075 = vmatprep.subr.mxu0 0.0
    %1076 = vmatpush1.msra.mxu0 0.0
    %1077 = vmatprep.subr.mxu0 0.0
    %1078 = vmatpush1.msra.mxu0 0.0
    %1079 = vmatprep.subr.mxu0 0.0
    %1080 = vmatpush1.msra.mxu0 0.0
    %1081 = vmatprep.subr.mxu0 0.0
    %1082 = vmatpush1.msra.mxu0 0.0
    %1083 = vmatprep.subr.mxu0 0.0
    %1084 = vmatpush1.msra.mxu0 0.0
    %1085 = vmatprep.subr.mxu0 0.0
    %1086 = vmatpush1.msra.mxu0 0.0
    %1087 = vmatprep.subr.mxu0 0.0
    %1088 = vmatpush1.msra.mxu0 0.0
    %1089 = vmatprep.subr.mxu0 0.0
    %1090 = vmatpush1.msra.mxu0 0.0
    %1091 = vmatprep.subr.mxu0 0.0
    %1092 = vmatpush1.msra.mxu0 0.0
    %1093 = vmatprep.subr.mxu0 0.0
    %1094 = vmatpush1.msra.mxu0 0.0
    %1095 = vmatprep.subr.mxu0 0.0
    %1096 = vmatpush1.msra.mxu0 0.0
    %1097 = vmatprep.subr.mxu0 0.0
    %1098 = vmatpush1.msra.mxu0 0.0
    %1099 = vmatprep.subr.mxu0 0.0
    %1100 = vmatpush1.msra.mxu0 0.0
    %1101 = vmatprep.subr.mxu0 0.0
    %1102 = vmatpush1.msra.mxu0 0.0
    %1103 = vmatprep.subr.mxu0 0.0
    %1104 = vmatpush1.msra.mxu0 0.0
    %1105 = vmatprep.mubr.f32.mxu0 0.0
    %v1106 = vand.u32 %v553, 4294901760
    %1107 = vmatmul.mubr.f32.gmra.mrb[0].mxu0 %v1106
    %v1108 = vpop.f32.mrb[0].mxu0
    %v1109 = vadd.f32 %v990, %v1108
    %v1110 = vpop.f32.mrb[0].mxu0
    %1111 = vdwg.mxu0
    %1112 = vmatprep.subr.mxu0 0.0
    %v1113 = vand.u32 %v43, 4294901760
    %1114 = vmatpush1.msra.mxu0 %v1113
    %1115 = vmatprep.subr.mxu0 0.0
    %v1116 = vand.u32 %v44, 4294901760
    %1117 = vmatpush1.msra.mxu0 %v1116
    %1118 = vmatprep.subr.mxu0 0.0
    %v1119 = vand.u32 %v45, 4294901760
    %1120 = vmatpush1.msra.mxu0 %v1119
    %1121 = vmatprep.subr.mxu0 0.0
    %v1122 = vand.u32 %v46, 4294901760
    %1123 = vmatpush1.msra.mxu0 %v1122
    %1124 = vmatprep.subr.mxu0 0.0
    %v1125 = vand.u32 %v47, 4294901760
    %1126 = vmatpush1.msra.mxu0 %v1125
    %1127 = vmatprep.subr.mxu0 0.0
    %v1128 = vand.u32 %v48, 4294901760
    %1129 = vmatpush1.msra.mxu0 %v1128
    %1130 = vmatprep.subr.mxu0 0.0
    %v1131 = vand.u32 %v49, 4294901760
    %1132 = vmatpush1.msra.mxu0 %v1131
    %1133 = vmatprep.subr.mxu0 0.0
    %v1134 = vand.u32 %v50, 4294901760
    %1135 = vmatpush1.msra.mxu0 %v1134
    %1136 = vmatprep.subr.mxu0 0.0
    %v1137 = vand.u32 %v51, 4294901760
    %1138 = vmatpush1.msra.mxu0 %v1137
    %1139 = vmatprep.subr.mxu0 0.0
    %v1140 = vand.u32 %v52, 4294901760
    %1141 = vmatpush1.msra.mxu0 %v1140
    %1142 = vmatprep.subr.mxu0 0.0
    %v1143 = vand.u32 %v53, 4294901760
    %1144 = vmatpush1.msra.mxu0 %v1143
    %1145 = vmatprep.subr.mxu0 0.0
    %v1146 = vand.u32 %v54, 4294901760
    %1147 = vmatpush1.msra.mxu0 %v1146
    %1148 = vmatprep.subr.mxu0 0.0
    %v1149 = vand.u32 %v55, 4294901760
    %1150 = vmatpush1.msra.mxu0 %v1149
    %1151 = vmatprep.subr.mxu0 0.0
    %v1152 = vand.u32 %v56, 4294901760
    %1153 = vmatpush1.msra.mxu0 %v1152
    %1154 = vmatprep.subr.mxu0 0.0
    %v1155 = vand.u32 %v57, 4294901760
    %1156 = vmatpush1.msra.mxu0 %v1155
    %1157 = vmatprep.subr.mxu0 0.0
    %v1158 = vand.u32 %v58, 4294901760
    %1159 = vmatpush1.msra.mxu0 %v1158
    %1160 = vmatprep.subr.mxu0 0.0
    %1161 = vmatpush1.msra.mxu0 0.0
    %1162 = vmatprep.subr.mxu0 0.0
    %1163 = vmatpush1.msra.mxu0 0.0
    %1164 = vmatprep.subr.mxu0 0.0
    %1165 = vmatpush1.msra.mxu0 0.0
    %1166 = vmatprep.subr.mxu0 0.0
    %1167 = vmatpush1.msra.mxu0 0.0
    %1168 = vmatprep.subr.mxu0 0.0
    %1169 = vmatpush1.msra.mxu0 0.0
    %1170 = vmatprep.subr.mxu0 0.0
    %1171 = vmatpush1.msra.mxu0 0.0
    %1172 = vmatprep.subr.mxu0 0.0
    %1173 = vmatpush1.msra.mxu0 0.0
    %1174 = vmatprep.subr.mxu0 0.0
    %1175 = vmatpush1.msra.mxu0 0.0
    %1176 = vmatprep.subr.mxu0 0.0
    %1177 = vmatpush1.msra.mxu0 0.0
    %1178 = vmatprep.subr.mxu0 0.0
    %1179 = vmatpush1.msra.mxu0 0.0
    %1180 = vmatprep.subr.mxu0 0.0
    %1181 = vmatpush1.msra.mxu0 0.0
    %1182 = vmatprep.subr.mxu0 0.0
    %1183 = vmatpush1.msra.mxu0 0.0
    %1184 = vmatprep.subr.mxu0 0.0
    %1185 = vmatpush1.msra.mxu0 0.0
    %1186 = vmatprep.subr.mxu0 0.0
    %1187 = vmatpush1.msra.mxu0 0.0
    %1188 = vmatprep.subr.mxu0 0.0
    %1189 = vmatpush1.msra.mxu0 0.0
    %1190 = vmatprep.subr.mxu0 0.0
    %1191 = vmatpush1.msra.mxu0 0.0
    %1192 = vmatprep.mubr.f32.mxu0 0.0
    %v1193 = vand.u32 %v553, 4294901760
    %1194 = vmatmul.mubr.f32.gmra.mrb[0].mxu0 %v1193
    %v1195 = vpop.f32.mrb[0].mxu0
    %v1196 = vadd.f32 %v1109, %v1195
    %v1197 = vpop.f32.mrb[0].mxu0
    %1198 = vdwg.mxu0
    %v1199 = vlaneseq
    %v1200 = vand.u32 %v1199, 127
    %v1201 = vlaneseq
    %v1202 = vshrl.u32 %v1201, 7
    %vm1203 = vcmp.ge.s32.totalorder %v1200, 3
    %vm1204 = vcmp.lt.s32.totalorder %v1202, 8
    %vm1205 = vmand %vm1203, %vm1204
    %v1206 = vsel %vm1205, %v1196, 0.0
    %v1207 = vmul.f32 %v1206, %v1206
    %1208 = vadd.xlane.f32.xlu0 %v1207
    %v1209 = vpop.xlane.xlu0 %1208
    %vm1210 = vcmask 7168
    %v1211 = vsel %vm1210, %v1209, 0.0
    %1212 = vadd.xlane.f32.xlu0 %v1211
    %v1213 = vpop.xlane.xlu0 %1212
    %v1214 = vrot.slane %v1213, 4
    %v1215 = vadd.f32 %v1213, %v1214
    %v1216 = vrot.slane %v1215, 2
    %v1217 = vadd.f32 %v1215, %v1216
    %v1218 = vrot.slane %v1217, 1
    %v1219 = vadd.f32 %v1217, %v1218
    %s1220 = vtos %v1219
    %v1221 = vstv %s1220
    %v1222 = vrsqrt.pop %v1221
    %s1223 = vtos %v1222
    %v1224 = vstv %s1223
    %v1225 = vsel %vm1203, %v1224, 1.0
    %v1226 = vmul.f32 %v1196, %v1225
    %1227 = vst [vmem:[%s2] sm:$0xff] %v1226
    // Predicated region
    $region18: #{forward.1} parent=1 // pred_check
      _
    $region19: #{forward.1} parent=1 // pred_check_branch
      %1229 = sbr.rel (0) target = $region21
    $region20: #{forward.1} parent=1 // pred_region
      _
    $region21: #{forward.1} parent=1 // pred_fallthru
      _
    // Predicated region
    $region22: #{forward.1} parent=1 // pred_check
      _
    $region23: #{forward.1} parent=1 // pred_check_branch
      %1231 = sbr.rel (0) target = $region25
    $region24: #{forward.1} parent=1 // pred_region
      _
    $region25: #{forward.1} parent=1 // pred_fallthru
      _
    %1232 = vsyncpa [#allocation3], 1
    %1233 = vsyncpa [#allocation5], 1

</llo_original>
